<compile_context>
chip_gen: v7x
topology: tpu7x:2x2x1
jax: 0.10.0
libtpu: 0.0.40
codegen_flags: <defaults>
</compile_context>

<pallas_src>
import functools

import jax
import jax.numpy as jnp
from jax import lax
from jax.experimental import pallas as pl
from jax.experimental.pallas import tpu as pltpu

NEG_INF_FILL = -9000000000000000.0   # matches torch masked_fill value
COS_EPS = 1e-8                       # F.cosine_similarity eps (clamp on ||x||^2)


def _round_up(x, m):
    return ((x + m - 1) // m) * m


def _pick_divisor(n, preferred):
    for t in preferred:
        if n % t == 0:
            return t
    return None


def _vmem_capacity_bytes():
    """Physical per-core VMEM; conservative 64 MiB (v7x-sized) fallback."""
    try:
        return int(pltpu.get_tpu_info().vmem_capacity_bytes)
    except Exception:
        return 64 * 1024 * 1024


# ---------------- pass 1: row normalize + fold 1/sqrt(T), emit sim_dtype ----------------

def _row_normalize_kernel(x_ref, out_ref, *, inv_scale):
    """out = x * rsqrt(max(||x||^2, eps)) * (1 / sqrt(T)), per row, cast to out dtype."""
    x = x_ref[...].astype(jnp.float32)
    sq = jnp.sum(x * x, axis=-1, keepdims=True)
    inv_norm = lax.rsqrt(jnp.maximum(sq, COS_EPS))          # EUP slot
    out_ref[...] = (x * (inv_norm * inv_scale)).astype(out_ref.dtype)


# ---------------- pass 2a: block-aligned flash sweep (fast path) ----------------

def _simclr_flash_aligned_kernel(xq_ref, xk_ref, xr_ref, nll_ref, hit_ref,
                                 pos_sc, m_sc, l_sc, c_sc,
                                 *, t, nblocks, off_b, fill):
    qi = pl.program_id(0)
    ki = pl.program_id(1)

    @pl.when(ki == 0)
    def _init():
        m_sc[...] = jnp.full_like(m_sc, -jnp.inf)
        l_sc[...] = jnp.zeros_like(l_sc)
        c_sc[...] = jnp.zeros_like(c_sc)
        # Positive logit per row, from the same bf16 inputs the MXU sees
        # (xr_ref holds x_hat[(i - N/2) mod N] for this row block).  Once per qi.
        pos_sc[...] = jnp.sum(xq_ref[...].astype(jnp.float32) *
                              xr_ref[...].astype(jnp.float32),
                              axis=-1, keepdims=True)

    # (t, t) similarity tile: bf16 x bf16 on the MXU, f32 accumulation, no transpose.
    s = lax.dot_general(xq_ref[...], xk_ref[...],
                        dimension_numbers=(((1,), (1,)), ((), ())),
                        preferred_element_type=jnp.float32)
    pos = pos_sc[...]

    is_diag = ki == qi                                        # tile holds the self diagonal
    is_pos = ki == (qi + (nblocks - off_b)) % nblocks         # tile holds the positive cols
    # (disjoint because 0 < off_b < nblocks)

    def _lse_update(sv):
        m_prev = m_sc[...]
        m_new = jnp.maximum(m_prev, jnp.max(sv, axis=-1, keepdims=True))
        l_sc[...] = (l_sc[...] * jnp.exp(m_prev - m_new) +
                     jnp.sum(jnp.exp(sv - m_new), axis=-1, keepdims=True))
        m_sc[...] = m_new

    def _count_update(gt):
        c_sc[...] = c_sc[...] + jnp.sum(gt.astype(jnp.float32), axis=-1, keepdims=True)

    def _local_identity():
        # On aligned tiles both the self and the positive entries sit on the
        # local diagonal -> no global iotas, no integer mod.
        return (lax.broadcasted_iota(jnp.int32, (t, 1), 0) ==
                lax.broadcasted_iota(jnp.int32, (1, t), 1))

    @pl.when(is_diag)
    def _diag_tile():
        sm = jnp.where(_local_identity(), fill, s)     # fill-then-/T order of the reference
        _lse_update(sm)
        _count_update(sm > pos)

    @pl.when(is_pos)
    def _pos_tile():
        _lse_update(s)
        # strict '>' + explicit positive-column exclusion: ties rank the positive
        # first and MXU/VPU last-ulp differences cannot count the positive itself.
        _count_update(jnp.logical_and(s > pos, jnp.logical_not(_local_identity())))

    @pl.when(jnp.logical_and(jnp.logical_not(is_diag), jnp.logical_not(is_pos)))
    def _plain_tile():
        _lse_update(s)
        _count_update(s > pos)

    @pl.when(ki == nblocks - 1)
    def _finalize():
        nll_ref[...] = m_sc[...] + jnp.log(l_sc[...]) - pos_sc[...]
        hit_ref[...] = (c_sc[...] < 5.0).astype(jnp.float32)


# ---------------- pass 2b: general fallback (any even N) ----------------

def _simclr_flash_general_kernel(xq_ref, xk_ref, pos_ref, pcol_ref,
                                 nll_ref, hit_ref, m_sc, l_sc, c_sc,
                                 *, tq, tk, fill):
    qi = pl.program_id(0)
    ki = pl.program_id(1)

    @pl.when(ki == 0)
    def _init():
        m_sc[...] = jnp.full_like(m_sc, -jnp.inf)
        l_sc[...] = jnp.zeros_like(l_sc)
        c_sc[...] = jnp.zeros_like(c_sc)

    s = lax.dot_general(xq_ref[...], xk_ref[...],
                        dimension_numbers=(((1,), (1,)), ((), ())),
                        preferred_element_type=jnp.float32)
    g_row = qi * tq + lax.broadcasted_iota(jnp.int32, (tq, 1), 0)
    g_col = ki * tk + lax.broadcasted_iota(jnp.int32, (1, tk), 1)
    s = jnp.where(g_row == g_col, fill, s)

    pos = pos_ref[...]
    m_prev = m_sc[...]
    m_new = jnp.maximum(m_prev, jnp.max(s, axis=-1, keepdims=True))
    l_sc[...] = (l_sc[...] * jnp.exp(m_prev - m_new) +
                 jnp.sum(jnp.exp(s - m_new), axis=-1, keepdims=True))
    m_sc[...] = m_new

    # pcol_ref is precomputed in the wrapper -> no in-kernel integer mod.
    gt = jnp.logical_and(s > pos, g_col != pcol_ref[...])
    c_sc[...] = c_sc[...] + jnp.sum(gt.astype(jnp.float32), axis=-1, keepdims=True)

    @pl.when(ki == pl.num_programs(1) - 1)
    def _finalize():
        nll_ref[...] = m_sc[...] + jnp.log(l_sc[...]) - pos
        hit_ref[...] = (c_sc[...] < 5.0).astype(jnp.float32)


# ---------------- wrapper ----------------

def simclr_loss(feats, temperature: float = 0.07, sim_dtype=jnp.bfloat16):
    """SimCLR NT-Xent forward.  feats: (N, D), two augmented views stacked along N.

    Returns (nll, acc) like the torch reference.  sim_dtype=jnp.bfloat16 runs the
    similarity matmul natively on the MXU (f32 accumulation); pass jnp.float32 for
    bit-closer parity with the f32 torch reference.
    """
    n, d = feats.shape
    assert n % 2 == 0 and n >= 2, "SimCLR loss expects an even number of stacked views"
    half = n // 2

    # Pad the feature dim to a multiple of 128 (zero columns change neither norms
    # nor dot products) so the MXU contraction depth / lane layout is dense.
    d_pad = max(128, _round_up(d, 128))
    x = feats.astype(jnp.float32)
    if d_pad != d:
        x = jnp.pad(x, ((0, 0), (0, d_pad - d)))

    vmem_cap = _vmem_capacity_bytes()
    vmem_limit = min(int(0.9 * vmem_cap), 100 * 1024 * 1024)
    item = jnp.finfo(sim_dtype).bits // 8

    # ---- pass 1: row normalization + 1/sqrt(T) fold (Pallas, O(N*D)) ----
    # Tile derived from a byte budget (double-buffered f32 in + sim_dtype out).
    tr = None
    for cand in (2048, 1024, 512, 256, 128, 64, 32, 16, 8):
        if n % cand == 0 and 2 * cand * d_pad * (4 + item) <= min(vmem_limit // 2, 16 << 20):
            tr = cand
            break
    if tr is None:
        tr = n
    inv_scale = 1.0 / (float(temperature) ** 0.5)
    x_hat = pl.pallas_call(
        functools.partial(_row_normalize_kernel, inv_scale=inv_scale),
        out_shape=jax.ShapeDtypeStruct((n, d_pad), sim_dtype),
        grid=(n // tr,),
        in_specs=[pl.BlockSpec((tr, d_pad), lambda i: (i, 0))],
        out_specs=pl.BlockSpec((tr, d_pad), lambda i: (i, 0)),
        compiler_params=pltpu.CompilerParams(
            dimension_semantics=("parallel",),
            vmem_limit_bytes=vmem_limit),
    )(x)

    fill = NEG_INF_FILL / float(temperature)
    out_shapes = (jax.ShapeDtypeStruct((n, 1), jnp.float32),
                  jax.ShapeDtypeStruct((n, 1), jnp.float32))

    # ---- pass 2: flash-style tiled logsumexp + rank sweep (Pallas, O(N^2*D)) ----
    # Fast path: tq == tk == t with t | N/2, sized against the real VMEM capacity:
    # v5e/v6e (128 MiB physical) can take t up to 1024, v7x (64 MiB/TC) stays <= 512.
    # t | N/2 also guarantees an even number (>= 2) of "parallel" row blocks (v7x TCs).
    t = None
    for cand in (1024, 512, 256, 128, 64, 32, 16, 8):
        if half % cand:
            continue
        need = 3 * 2 * cand * d_pad * item + 8 * cand * cand * 4   # dbl-buf inputs + temps
        if need <= vmem_cap // 2:
            t = cand
            break

    if t is not None:
        nblocks = n // t
        off_b = half // t            # 0 < off_b < nblocks  ->  diag / pos tiles disjoint
        kernel = functools.partial(_simclr_flash_aligned_kernel,
                                   t=t, nblocks=nblocks, off_b=off_b, fill=fill)
        nll_rows, hit_rows = pl.pallas_call(
            kernel,
            out_shape=out_shapes,
            grid=(nblocks, nblocks),                               # key axis last
            in_specs=[
                pl.BlockSpec((t, d_pad), lambda qi, ki: (qi, 0)),  # query rows
                pl.BlockSpec((t, d_pad), lambda qi, ki: (ki, 0)),  # key rows
                # rolled rows: x_hat[(i - N/2) mod N] for this row block (ki-invariant)
                pl.BlockSpec((t, d_pad),
                             lambda qi, ki: ((qi + nblocks - off_b) % nblocks, 0)),
            ],
            out_specs=(pl.BlockSpec((t, 1), lambda qi, ki: (qi, 0)),   # per-row nll
                       pl.BlockSpec((t, 1), lambda qi, ki: (qi, 0))),  # per-row top-5 hit
            scratch_shapes=[pltpu.VMEM((t, 1), jnp.float32)] * 4,      # pos, m, l, count
            compiler_params=pltpu.CompilerParams(
                dimension_semantics=("parallel", "arbitrary"),
                vmem_limit_bytes=vmem_limit),
        )(x_hat, x_hat, x_hat)
    else:
        # General fallback for awkward / tiny batch sizes: masks on every tile,
        # pos and pos_col precomputed in the wrapper from the same sim_dtype x_hat.
        # TODO(synk): pad N to a 128-friendly size + mask padded rows instead of
        # falling back to full-extent blocks for awkward batch sizes.
        tq = _pick_divisor(n, (256, 128, 64, 32, 16, 8)) or n
        tk = _pick_divisor(n, (512, 256, 128)) or n
        x32 = x_hat.astype(jnp.float32)
        pos = jnp.sum(x32 * jnp.roll(x32, half, axis=0), axis=-1, keepdims=True)
        pos_col = ((jnp.arange(n, dtype=jnp.int32) - half) % n)[:, None]
        kernel = functools.partial(_simclr_flash_general_kernel, tq=tq, tk=tk, fill=fill)
        nll_rows, hit_rows = pl.pallas_call(
            kernel,
            out_shape=out_shapes,
            grid=(n // tq, n // tk),
            in_specs=[
                pl.BlockSpec((tq, d_pad), lambda qi, ki: (qi, 0)),
                pl.BlockSpec((tk, d_pad), lambda qi, ki: (ki, 0)),
                pl.BlockSpec((tq, 1), lambda qi, ki: (qi, 0)),     # positives
                pl.BlockSpec((tq, 1), lambda qi, ki: (qi, 0)),     # positive column ids
            ],
            out_specs=(pl.BlockSpec((tq, 1), lambda qi, ki: (qi, 0)),
                       pl.BlockSpec((tq, 1), lambda qi, ki: (qi, 0))),
            scratch_shapes=[pltpu.VMEM((tq, 1), jnp.float32)] * 3,
            compiler_params=pltpu.CompilerParams(
                dimension_semantics=("parallel", "arbitrary"),
                vmem_limit_bytes=vmem_limit),
        )(x_hat, x_hat, pos, pos_col)

    nll = jnp.mean(nll_rows)
    acc = jnp.mean(hit_rows)
    return nll, acc


if __name__ == "__main__":
    key = jax.random.PRNGKey(0)
    # Small SimCLR-style batch: 2 augmented views x 16 samples = 32 feature rows, dim 32.
    N, D = 32, 32
    feats = jax.random.normal(key, (N, D), dtype=jnp.float32)

    nll, acc = simclr_loss(feats, temperature=0.07)
    jax.block_until_ready((nll, acc))
    print("KERNEL_OK")
</pallas_src>

<mosaic_0001>
module attributes {stable_mosaic.version = 11 : i64} {
  func.func @_row_normalize_kernel(%arg0: i32, %arg1: memref<32x128xf32, #tpu.memory_space<vmem>>, %arg2: memref<32x128xbf16, #tpu.memory_space<vmem>>) attributes {dimension_semantics = [#tpu.dimension_semantics<parallel>], iteration_bounds = array<i64: 1>, scalar_prefetch = 0 : i64, scratch_operands = 0 : i64, tpu.core_type = #tpu.core_type<tc>, window_params = [{transform_indices = @transform_0, window_bounds = array<i64: 32, 128>}, {transform_indices = @transform_1, window_bounds = array<i64: 32, 128>}]} {
    %c0 = arith.constant 0 : index
    %c0_0 = arith.constant 0 : index
    %0 = vector.load %arg1[%c0, %c0_0] : memref<32x128xf32, #tpu.memory_space<vmem>>, vector<32x128xf32>
    %1 = arith.mulf %0, %0 : vector<32x128xf32>
    %cst = arith.constant dense<0.000000e+00> : vector<32xf32>
    %2 = vector.multi_reduction <add>, %1, %cst [1] : vector<32x128xf32> to vector<32xf32>
    %3 = vector.shape_cast %2 : vector<32xf32> to vector<32x1xf32>
    %cst_1 = arith.constant 9.99999993E-9 : f32
    %4 = vector.broadcast %cst_1 : f32 to vector<32x1xf32>
    %5 = arith.maximumf %3, %4 : vector<32x1xf32>
    %6 = math.rsqrt %5 : vector<32x1xf32>
    %cst_2 = arith.constant 3.77964473 : f32
    %7 = vector.broadcast %cst_2 : f32 to vector<32x1xf32>
    %8 = arith.mulf %6, %7 : vector<32x1xf32>
    %9 = vector.broadcast %8 : vector<32x1xf32> to vector<32x128xf32>
    %10 = arith.mulf %0, %9 : vector<32x128xf32>
    %11 = arith.truncf %10 : vector<32x128xf32> to vector<32x128xbf16>
    %c0_3 = arith.constant 0 : index
    %c0_4 = arith.constant 0 : index
    %12 = vector.load %arg2[%c0_3, %c0_4] : memref<32x128xbf16, #tpu.memory_space<vmem>>, vector<32x128xbf16>
    tpu.vector_store %arg2[%c0_3, %c0_4], %11 {strides = array<i32>} : memref<32x128xbf16, #tpu.memory_space<vmem>>, vector<32x128xbf16>,
    return
  }
  func.func @transform_0(%arg0: i32) -> (i32, i32) {
    %c0_i32 = arith.constant 0 : i32
    %c0_i32_0 = arith.constant 0 : i32
    return %arg0, %c0_i32 : i32, i32
  }
  func.func @transform_1(%arg0: i32) -> (i32, i32) {
    %c0_i32 = arith.constant 0 : i32
    %c0_i32_0 = arith.constant 0 : i32
    return %arg0, %c0_i32 : i32, i32
  }
}

</mosaic_0001>

<llo_original>
// kernel: tpu_custom_call.1
$region0: #{tpu_custom_call.1}
  #allocation0 [shape = 'u32[]', space=smem, size = 0x4, offset = 0x4, fixed_abs, tag = 'smem constant byte address 0x4 - core index']
  #allocation1 [shape = 'u32[144,128]{1,0:T(1,128)}', space=vmem, size = 0x12000, scoped, tag = 'internal scratch']
  %s0 = inlined_call_operand.hbm [shape: f32[32,128], index: 0, kind: input, shape index: {}]
  %s1 = inlined_call_operand.hbm [shape: bf16[32,128], index: 1, kind: output, shape index: {}]
  %s2 = sld [smem:[#allocation0]]
  $region18: #{tpu_custom_call.1} parent=0
    _
  %s4 = ssub.s32 1, %s2
  %s5 = scalar_select 0, %s4, %s2
  $region1: #{tpu_custom_call.1} parent=0
    #allocation2 [shape = 'u8[16384]{0}', space=vmem, size = 0x4000, scoped, tag = 'input window, operand 0, single buffered']
    #allocation3 [shape = 's32[1]{0}', space=sflag, size = 0x4, scoped, tag = 'scoped memory for tpu_custom_call.1']
    #allocation4 [shape = 's32[1]{0}', space=sflag, size = 0x4, scoped, tag = 'scoped memory for tpu_custom_call.1']
    #allocation5 [shape = 'u8[8192]{0}', space=vmem, size = 0x2000, scoped, tag = 'output window, operand 0, single buffered']
    %6 = vsyncpa [#allocation3], 0
    %7 = vsyncpa [#allocation4], 0
    // Predicated region
    $region2: #{tpu_custom_call.1} parent=1 // pred_check
      _
    $region3: #{tpu_custom_call.1} parent=1 // pred_check_branch
      %9 = sbr.rel (0) target = $region5
    $region4: #{tpu_custom_call.1} parent=1 // pred_region
      %s11 = ssub.s32 512, 512
      %12 = vsyncadd [#allocation3], %s11
      %s13 = sshll.u32 [#allocation2], 4
      %s14 = int_to_ptr.vmem [resolvable:$true] %s13
      %19 = dma.hbm_to_vmem [thread:$0]  %s0, 512, %s14, [#allocation3], 128, 128, 8
    $region5: #{tpu_custom_call.1} parent=1 // pred_fallthru
      _
    // Predicated region
    $region6: #{tpu_custom_call.1} parent=1 // pred_check
      _
    $region7: #{tpu_custom_call.1} parent=1 // pred_check_branch
      %21 = sbr.rel (0) target = $region9
    $region8: #{tpu_custom_call.1} parent=1 // pred_region
      %22 = dma.done [#allocation3], 512
    $region9: #{tpu_custom_call.1} parent=1 // pred_fallthru
      _
    %v23 = vld [vmem:[#allocation2] sm:$0xff]
    %v24 = vld [vmem:[#allocation2 + $0x8] sm:$0xff]
    %v25 = vld [vmem:[#allocation2 + $0x10] sm:$0xff]
    %v26 = vld [vmem:[#allocation2 + $0x18] sm:$0xff]
    %v27 = vmul.f32 %v23, %v23
    %v28 = vmul.f32 %v24, %v24
    %v29 = vmul.f32 %v25, %v25
    %v30 = vmul.f32 %v26, %v26
    %31 = vadd.xlane.f32.xlu0 %v27
    %v32 = vpop.xlane.xlu0 %31
    %33 = vadd.xlane.f32.xlu0 %v28
    %v34 = vpop.xlane.xlu0 %33
    %35 = vadd.xlane.f32.xlu0 %v29
    %v36 = vpop.xlane.xlu0 %35
    %37 = vadd.xlane.f32.xlu0 %v30
    %v38 = vpop.xlane.xlu0 %37
    %v39 = vmax.f32 %v32, 1e-08
    %v40 = vmax.f32 %v34, 1e-08
    %v41 = vmax.f32 %v36, 1e-08
    %v42 = vmax.f32 %v38, 1e-08
    %v43 = vrsqrt.pop %v39
    %v44 = vrsqrt.pop %v40
    %v45 = vrsqrt.pop %v41
    %v46 = vrsqrt.pop %v42
    %v47 = vmul.f32 %v43, 3.7796447
    %v48 = vmul.f32 %v44, 3.7796447
    %v49 = vmul.f32 %v45, 3.7796447
    %v50 = vmul.f32 %v46, 3.7796447
    %v51 = vmul.f32 %v23, %v47
    %v52 = vmul.f32 %v24, %v48
    %v53 = vmul.f32 %v25, %v49
    %v54 = vmul.f32 %v26, %v50
    %v55 = vpack.c.bf16 %v52, %v51
    %v56 = vpack.c.bf16 %v54, %v53
    %v59 = vunpack.c.l.b16 %v55
    %v60 = vunpack.c.h.b16 %v55
    %v61 = vunpack.c.l.b16 %v56
    %v62 = vunpack.c.h.b16 %v56
    %v63 = vpack.c.b16 %v59, %v59
    %v64 = vpack.c.b16 %v60, %v60
    %v65 = vpack.c.b16 %v61, %v61
    %v66 = vpack.c.b16 %v62, %v62
    %71 = vst [vmem:[#allocation5] sm:$0xf] %v63
    %72 = vst [vmem:[#allocation5 + $0x4] sm:$0xf] %v64
    %73 = vst [vmem:[#allocation5 + $0x8] sm:$0xf] %v65
    %74 = vst [vmem:[#allocation5 + $0xc] sm:$0xf] %v66
    // Predicated region
    $region10: #{tpu_custom_call.1} parent=1 // pred_check
      _
    $region11: #{tpu_custom_call.1} parent=1 // pred_check_branch
      %76 = sbr.rel (0) target = $region13
    $region12: #{tpu_custom_call.1} parent=1 // pred_region
      %s78 = ssub.s32 256, 256
      %79 = vsyncadd [#allocation4], %s78
      %s80 = sshll.u32 [#allocation5], 4
      %s81 = int_to_ptr.vmem [resolvable:$true] %s80
      %86 = dma.vmem_to_hbm [thread:$0]  %s81, 256, %s1, [#allocation4], 64, 64, 4
    $region13: #{tpu_custom_call.1} parent=1 // pred_fallthru
      _
    // Predicated region
    $region14: #{tpu_custom_call.1} parent=1 // pred_check
      _
    $region15: #{tpu_custom_call.1} parent=1 // pred_check_branch
      %88 = sbr.rel (0) target = $region17
    $region16: #{tpu_custom_call.1} parent=1 // pred_region
      %89 = dma.done [#allocation4], 256
    $region17: #{tpu_custom_call.1} parent=1 // pred_fallthru
      _
    %90 = vsyncpa [#allocation3], 1
    %91 = vsyncpa [#allocation4], 1

</llo_original>
